<compile_context>
chip_gen: v6e
topology: v6e:2x2x1
jax: 0.10.0
libtpu: 0.0.40
codegen_flags: <defaults>
</compile_context>

<pallas_src>
import numpy as np
import jax
import jax.numpy as jnp
from jax.experimental import pallas as pl
from jax.experimental.pallas import tpu as pltpu


# ----------------------------------------------------------------------------
# Kernel: one compare + one cast + one shallow one-hot MXU dot per tile.
# ----------------------------------------------------------------------------
def _tag_tree_kernel(idx_ref, table_ref, out_ref):
    """
    idx_ref:   [TILE_N, 1] int32   combined index  s*22 + a*11 + clip(r+5,0,10)
    table_ref: [48, D]     float32 fused table (rows 0-43 valid, 44-47 zero pad)
    out_ref:   [TILE_N, D] out_dtype
    """
    tn = out_ref.shape[0]
    v = table_ref.shape[0]                                     # 48

    cidx = idx_ref[:, 0:1]                                     # [TILE_N, 1]
    iota = jax.lax.broadcasted_iota(jnp.int32, (tn, v), 1)
    onehot = (cidx == iota).astype(jnp.float32)                # single cmp + cast

    acc = jnp.dot(onehot, table_ref[...],
                  preferred_element_type=jnp.float32)
    out_ref[...] = acc.astype(out_ref.dtype)


# ----------------------------------------------------------------------------
# Parameter folding (done once, outside the kernel)
# ----------------------------------------------------------------------------
_N_SUBST, _N_ADJ, _N_REL = 2, 2, 11
_VALID_ROWS = _N_SUBST * _N_ADJ * _N_REL          # 44
_TABLE_ROWS = 48                                   # padded to a multiple of 8


def _fold_params(params):
    e_s, e_a, e_r = params["e_subst"], params["e_adj"], params["e_rel"]
    w, b = params["w_fusion"], params["b_fusion"]
    d4 = e_s.shape[1]
    d_model = w.shape[1]
    t_s = e_s @ w[0:d4, :]                         # [2,  D]
    t_a = e_a @ w[d4:2 * d4, :]                    # [2,  D]
    t_r = e_r @ w[2 * d4:3 * d4, :]                # [11, D]
    # Outer-product fused table: row (s, a, r) -> s*22 + a*11 + r.
    tbl = (t_s[:, None, None, :] + t_a[None, :, None, :]
           + t_r[None, None, :, :] + b[None, None, None, :])
    tbl = tbl.reshape(_VALID_ROWS, d_model).astype(jnp.float32)
    return jnp.pad(tbl, ((0, _TABLE_ROWS - _VALID_ROWS), (0, 0)))   # [48, D]


# ----------------------------------------------------------------------------
# Tile selection: avoid padding (and the post-kernel slice copy) when possible,
# keep grid >= 2 so v7x megacore can split the "parallel" axis.
# ----------------------------------------------------------------------------
def _choose_tile_n(n, cap):
    cap = max(8, min(cap, n))
    cap8 = max(8, (cap // 8) * 8)
    if n % 8 == 0:
        t = 0
        for cand in range(cap8, 7, -8):
            if n % cand == 0 and n // cand >= 2:
                t = cand
                break
        if t >= max(8, cap8 // 8):         # reasonably large divisor -> no pad
            return t, n
        if n <= cap8:                      # whole problem fits one tile, no pad
            return n, n
    return cap8, pl.cdiv(n, cap8) * cap8   # fall back: pad (tail sliced off)


# ----------------------------------------------------------------------------
# Wrapper
# ----------------------------------------------------------------------------
def tag_tree_encoding(subst_nodes, adj_nodes, rel_positions, params, *,
                      tile_n=2048, out_dtype=jnp.float32):
    """
    subst_nodes, adj_nodes, rel_positions: [B, S] int32
    returns: [B, S, d_model] out_dtype
    """
    b, s = subst_nodes.shape
    n = b * s
    d_model = params["w_fusion"].shape[1]

    table = _fold_params(params)                                   # [48, D]

    # Combined index computed where the old jnp.stack ran (same HBM traffic).
    rel_idx = jnp.clip(rel_positions + 5, 0, 10)
    cidx = (subst_nodes * (_N_ADJ * _N_REL) + adj_nodes * _N_REL + rel_idx)
    cidx = cidx.astype(jnp.int32).reshape(n, 1)

    tile, n_pad = _choose_tile_n(n, tile_n)
    if n_pad != n:
        # Pad with an index that hits a zero table row -> padded outputs are 0.
        cidx = jnp.pad(cidx, ((0, n_pad - n), (0, 0)),
                       constant_values=_VALID_ROWS)
    grid = (n_pad // tile,)

    out_bytes = np.dtype(out_dtype).itemsize
    cost = pl.CostEstimate(
        flops=2 * n_pad * _TABLE_ROWS * d_model,
        transcendentals=0,
        bytes_accessed=n_pad * (4 + out_bytes * d_model)
                       + _TABLE_ROWS * d_model * 4)

    out = pl.pallas_call(
        _tag_tree_kernel,
        out_shape=jax.ShapeDtypeStruct((n_pad, d_model), out_dtype),
        grid=grid,
        in_specs=[
            pl.BlockSpec((tile, 1), lambda i: (i, 0)),              # combined idx
            pl.BlockSpec((_TABLE_ROWS, d_model), lambda i: (0, 0)), # resident table
        ],
        out_specs=pl.BlockSpec((tile, d_model), lambda i: (i, 0)),
        compiler_params=pltpu.CompilerParams(
            dimension_semantics=("parallel",),      # megacore split on v7x
            vmem_limit_bytes=32 * 1024 * 1024,
        ),
        cost_estimate=cost,
    )(cidx, table)

    if n_pad != n:
        out = out[:n]                               # only triggers on pad path
    return out.reshape(b, s, d_model)


# ----------------------------------------------------------------------------
# Parameter init (mirrors the PyTorch module's defaults)
# ----------------------------------------------------------------------------
def init_params(key, d_model):
    d4 = d_model // 4
    k1, k2, k3, k4, k5 = jax.random.split(key, 5)
    e_subst = jax.random.normal(k1, (2, d4), dtype=jnp.float32)
    e_adj = jax.random.normal(k2, (2, d4), dtype=jnp.float32)
    e_rel = jax.random.normal(k3, (11, d4), dtype=jnp.float32)
    fan_in = 3 * d4
    bound = 1.0 / (fan_in ** 0.5)
    w_fusion = jax.random.uniform(k4, (fan_in, d_model), jnp.float32, -bound, bound)
    b_fusion = jax.random.uniform(k5, (d_model,), jnp.float32, -bound, bound)
    return dict(e_subst=e_subst, e_adj=e_adj, e_rel=e_rel,
                w_fusion=w_fusion, b_fusion=b_fusion)


def reference_forward(subst, adj, rel, params):
    """Plain-JAX reference mirroring the PyTorch forward (unfolded)."""
    se = params["e_subst"][subst]
    ae = params["e_adj"][adj]
    rs = jnp.clip(rel + 5, 0, 10)
    re = params["e_rel"][rs]
    combined = jnp.concatenate([se, ae, re], axis=-1)
    return combined @ params["w_fusion"] + params["b_fusion"]


if __name__ == "__main__":
    batch, seq, d_model = 4, 64, 128      # N = 256 -> tile 128, grid 2, no padding
    key = jax.random.PRNGKey(0)
    kp, k1, k2, k3 = jax.random.split(key, 4)

    params = init_params(kp, d_model)
    subst_nodes = jax.random.randint(k1, (batch, seq), 0, 2, dtype=jnp.int32)
    adj_nodes = jax.random.randint(k2, (batch, seq), 0, 2, dtype=jnp.int32)
    rel_positions = jax.random.randint(k3, (batch, seq), -7, 8, dtype=jnp.int32)

    ref = reference_forward(subst_nodes, adj_nodes, rel_positions, params)

    # f32 output: exact-semantics path.
    out = jax.block_until_ready(
        tag_tree_encoding(subst_nodes, adj_nodes, rel_positions, params))
    assert out.shape == (batch, seq, d_model)
    assert jnp.allclose(out, ref, atol=1e-4, rtol=1e-4), "f32 mismatch vs reference"

    # bf16 output: halved HBM writeback path (looser tolerance by construction).
    out_bf16 = jax.block_until_ready(
        tag_tree_encoding(subst_nodes, adj_nodes, rel_positions, params,
                          out_dtype=jnp.bfloat16))
    assert jnp.allclose(out_bf16.astype(jnp.float32), ref,
                        atol=3e-2, rtol=3e-2), "bf16 mismatch vs reference"

    print("KERNEL_OK")
</pallas_src>

<mosaic_0001>
module attributes {stable_mosaic.version = 11 : i64} {
  func.func @_tag_tree_kernel(%arg0: i32, %arg1: memref<128x1xi32, #tpu.memory_space<vmem>>, %arg2: memref<48x128xf32, #tpu.memory_space<vmem>>, %arg3: memref<128x128xf32, #tpu.memory_space<vmem>>) attributes {dimension_semantics = [#tpu.dimension_semantics<parallel>], iteration_bounds = array<i64: 2>, scalar_prefetch = 0 : i64, scratch_operands = 0 : i64, tpu.core_type = #tpu.core_type<tc>, window_params = [{transform_indices = @transform_0, window_bounds = array<i64: 128, 1>}, {pipeline_mode = #tpu.pipeline_mode<synchronous>, transform_indices = @transform_1, window_bounds = array<i64: 48, 128>}, {transform_indices = @transform_2, window_bounds = array<i64: 128, 128>}]} {
    %c0 = arith.constant 0 : index
    %c0_0 = arith.constant 0 : index
    %0 = vector.load %arg1[%c0, %c0_0] : memref<128x1xi32, #tpu.memory_space<vmem>>, vector<128x1xi32>
    %1 = tpu.iota {dimensions = array<i32: 1>} : vector<128x48xi32>
    %2 = vector.broadcast %0 : vector<128x1xi32> to vector<128x48xi32>
    %3 = arith.cmpi eq, %2, %1 : vector<128x48xi32>
    %4 = arith.extui %3 : vector<128x48xi1> to vector<128x48xi32>
    %5 = arith.sitofp %4 : vector<128x48xi32> to vector<128x48xf32>
    %c0_1 = arith.constant 0 : index
    %c0_2 = arith.constant 0 : index
    %6 = vector.load %arg2[%c0_1, %c0_2] : memref<48x128xf32, #tpu.memory_space<vmem>>, vector<48x128xf32>
    %cst = arith.constant dense<0.000000e+00> : vector<128x128xf32>
    %7 = tpu.matmul %5, %6, %cst {dimension_numbers = #tpu.dot_dimension_numbers<[1], [0], [0], [1], [0, 0, 1, 1], [], []>} : vector<128x48xf32>, vector<48x128xf32>, vector<128x128xf32> -> vector<128x128xf32>
    %c0_3 = arith.constant 0 : index
    %c0_4 = arith.constant 0 : index
    %8 = vector.load %arg3[%c0_3, %c0_4] : memref<128x128xf32, #tpu.memory_space<vmem>>, vector<128x128xf32>
    tpu.vector_store %arg3[%c0_3, %c0_4], %7 {strides = array<i32>} : memref<128x128xf32, #tpu.memory_space<vmem>>, vector<128x128xf32>,
    return
  }
  func.func @transform_0(%arg0: i32) -> (i32, i32) {
    %c0_i32 = arith.constant 0 : i32
    %c0_i32_0 = arith.constant 0 : i32
    return %arg0, %c0_i32 : i32, i32
  }
  func.func @transform_1(%arg0: i32) -> (i32, i32) {
    %c0_i32 = arith.constant 0 : i32
    %c0_i32_0 = arith.constant 0 : i32
    %c0_i32_1 = arith.constant 0 : i32
    return %c0_i32, %c0_i32_0 : i32, i32
  }
  func.func @transform_2(%arg0: i32) -> (i32, i32) {
    %c0_i32 = arith.constant 0 : i32
    %c0_i32_0 = arith.constant 0 : i32
    return %arg0, %c0_i32 : i32, i32
  }
}

</mosaic_0001>

<llo_original>
// kernel: tpu_custom_call.1
$region0: #{tpu_custom_call.1}
  #allocation0 [shape = 'u32[]', space=smem, size = 0x4, offset = 0x4, fixed_abs, tag = 'smem constant byte address 0x4 - core index']
  #allocation1 [shape = 'u32[144,128]{1,0:T(1,128)}', space=vmem, size = 0x12000, scoped, tag = 'internal scratch']
  %s0 = inlined_call_operand.vmem [shape: s32[256,1], index: 0, kind: input, shape index: {}]
  %s1 = inlined_call_operand.vmem [shape: f32[48,128], index: 1, kind: input, shape index: {}]
  %s2 = inlined_call_operand.hbm [shape: f32[256,128], index: 2, kind: output, shape index: {}]
  %s3 = sld [smem:[#allocation0]]
  $region41: #{tpu_custom_call.1} parent=0
    _
  %s5 = ssub.s32 1, %s3
  %s6 = scalar_select 0, %s5, %s3
  $region1: #{tpu_custom_call.1} parent=0
    #allocation2 [shape = 'u8[131072]{0}', space=vmem, size = 0x20000, scoped, tag = 'output window, operand 0']
    #allocation3 [shape = 's32[2]{0}', space=sflag, size = 0x8, scoped, tag = 'scoped memory for tpu_custom_call.1']
    %7 = vsyncpa [#allocation3], 0
    %s8 = scalar_lea.sflag [#allocation3], 1
    %9 = vsyncpa %s8, 0
    loop: start=0, step=1, limit=4
    $region2: #{tpu_custom_call.1} parent=1 // loop_pre_header
      _
    $region3: #{tpu_custom_call.1} parent=1 // loop_header
      %s11 = sphi 0, %s15
      %p12 = scmp.ge.s32.totalorder %s11, 4
      %s21 = sphi 0, %s23
      %s24 = sphi 0, %s21
      %s25 = sphi 0, %s24
      %s41 = sphi 0, %s25
      %s45 = sphi 0, %s45
      %s47 = sphi 0, %s45
      %s48 = sphi 0, %s47
      %s62 = sphi 0, %s48
      %s68 = sphi 0, %s70
      %s71 = sphi 0, %s68
      %s72 = sphi 0, %s71
      %s88 = sphi 0, %s72
    $region4: #{tpu_custom_call.1} parent=1 // loop_header_branch
      %14 = sbr.rel (%p12) target = $region8
    $region5: #{tpu_custom_call.1} parent=1 // loop_body
      %s16 = ssub.s32 %s11, 1
      %s17 = ssub.s32 %s11, 2
      %s18 = sadd.s32 %s11, 1
      %s19 = ssub.s32 %s11, %s18
      %p20 = scmp.eq.s32.totalorder %s19, 0
      %s22 = sadd.s32 %s21, 1
      %s23 = scalar_select %p20, %s21, %s22
      %p26 = pneg %p20
      %p27 = scmp.eq.s32.totalorder %s11, 1
      %p28 = por %p26, %p27
      %p29 = scmp.ne.s32.totalorder %s21, %s24
      %p30 = scmp.eq.s32.totalorder %s11, 0
      %p31 = por %p29, %p30
      %p32 = scmp.ne.s32.totalorder %s21, %s24
      %p33 = scmp.eq.s32.totalorder %s16, 1
      %p34 = por %p32, %p33
      %p35 = scmp.ne.s32.totalorder %s24, %s25
      %p36 = scmp.eq.s32.totalorder %s16, 0
      %p37 = por %p35, %p36
      %p38 = scmp.ne.s32.totalorder %s24, %s25
      %p39 = scmp.eq.s32.totalorder %s17, 1
      %p40 = por %p38, %p39
      %p42 = scmp.ne.s32.totalorder %s25, %s41
      %p43 = scmp.eq.s32.totalorder %s17, 0
      %p44 = por %p42, %p43
      %s46 = sadd.s32 %s45, 1
      %p49 = scmp.eq.s32.totalorder %s11, 1
      %p50 = scmp.ne.s32.totalorder %s45, %s47
      %p51 = scmp.eq.s32.totalorder %s11, 0
      %p52 = por %p50, %p51
      %p53 = scmp.ne.s32.totalorder %s45, %s47
      %p54 = scmp.eq.s32.totalorder %s16, 1
      %p55 = por %p53, %p54
      %p56 = scmp.ne.s32.totalorder %s47, %s48
      %p57 = scmp.eq.s32.totalorder %s16, 0
      %p58 = por %p56, %p57
      %p59 = scmp.ne.s32.totalorder %s47, %s48
      %p60 = scmp.eq.s32.totalorder %s17, 1
      %p61 = por %p59, %p60
      %p63 = scmp.ne.s32.totalorder %s48, %s62
      %p64 = scmp.eq.s32.totalorder %s17, 0
      %p65 = por %p63, %p64
      %s66 = ssub.s32 %s11, %s18
      %p67 = scmp.eq.s32.totalorder %s66, 0
      %s69 = sadd.s32 %s68, 1
      %s70 = scalar_select %p67, %s68, %s69
      %p73 = pneg %p67
      %p74 = scmp.eq.s32.totalorder %s11, 1
      %p75 = por %p73, %p74
      %p76 = scmp.ne.s32.totalorder %s68, %s71
      %p77 = scmp.eq.s32.totalorder %s11, 0
      %p78 = por %p76, %p77
      %p79 = scmp.ne.s32.totalorder %s68, %s71
      %p80 = scmp.eq.s32.totalorder %s16, 1
      %p81 = por %p79, %p80
      %p82 = scmp.ne.s32.totalorder %s71, %s72
      %p83 = scmp.eq.s32.totalorder %s16, 0
      %p84 = por %p82, %p83
      %p85 = scmp.ne.s32.totalorder %s71, %s72
      %p86 = scmp.eq.s32.totalorder %s17, 1
      %p87 = por %p85, %p86
      %p89 = scmp.ne.s32.totalorder %s72, %s88
      %p90 = scmp.eq.s32.totalorder %s17, 0
      %p91 = por %p89, %p90
      %p92 = scmp.le.s32.totalorder 1, %s11
      %p93 = scmp.lt.s32.totalorder %s11, 3
      %p94 = pnand %p92, %p93
      %p95 = pneg %p94
      // Predicated region
      $region9: #{tpu_custom_call.1} parent=5 // pred_check
        _
      $region10: #{tpu_custom_call.1} parent=5 // pred_check_branch
        %97 = sbr.rel (%p94) target = $region12
      $region11: #{tpu_custom_call.1} parent=5 // pred_region
        %s98 = ssub.s32 %s11, 1
        // Predicated region
        $region13: #{tpu_custom_call.1} parent=11 // pred_check
          %p99 = pneg %p58
        $region14: #{tpu_custom_call.1} parent=11 // pred_check_branch
          %101 = sbr.rel (%p99) target = $region16
        $region15: #{tpu_custom_call.1} parent=11 // pred_region
          _
        $region16: #{tpu_custom_call.1} parent=11 // pred_fallthru
          _
      $region12: #{tpu_custom_call.1} parent=5 // pred_fallthru
        _
      %p102 = scmp.lt.s32.totalorder %s11, 2
      // Predicated region
      $region17: #{tpu_custom_call.1} parent=5 // pred_check
        %p103 = pneg %p102
      $region18: #{tpu_custom_call.1} parent=5 // pred_check_branch
        %105 = sbr.rel (%p103) target = $region20
      $region19: #{tpu_custom_call.1} parent=5 // pred_region
        // Predicated region
        $region21: #{tpu_custom_call.1} parent=19 // pred_check
          %p106 = pneg %p31
        $region22: #{tpu_custom_call.1} parent=19 // pred_check_branch
          %108 = sbr.rel (%p106) target = $region24
        $region23: #{tpu_custom_call.1} parent=19 // pred_region
          %s109 = smul.u32 16, %s11
          %p110 = scmp.lt.s32.totalorder %s109, 31
          %s111 = scalar_select %p110, %s109, 31
          %s112 = smul.addr %s111, 8
          %s113 = scalar_lea.vmem %s0, %s112
          %s114 = smul.u32 16, %s11
        $region24: #{tpu_custom_call.1} parent=19 // pred_fallthru
          _
      $region20: #{tpu_custom_call.1} parent=5 // pred_fallthru
        _
      %p115 = scmp.le.s32.totalorder 1, %s11
      %p116 = scmp.lt.s32.totalorder %s11, 3
      %p117 = pnand %p115, %p116
      %p118 = pneg %p117
      // Predicated region
      $region25: #{tpu_custom_call.1} parent=5 // pred_check
        _
      $region26: #{tpu_custom_call.1} parent=5 // pred_check_branch
        %120 = sbr.rel (%p117) target = $region28
      $region27: #{tpu_custom_call.1} parent=5 // pred_region
        %s121 = ssub.s32 %s11, 1
        %s122 = smul.u32 16, %s16
        %p123 = scmp.lt.s32.totalorder %s122, 31
        %s124 = scalar_select %p123, %s122, 31
        %s125 = smul.addr %s124, 8
        %s126 = scalar_lea.vmem %s0, %s125
        %p127 = pneg %p37
        %p128 = pneg %p34
        %p129 = pneg %p58
        %p130 = pneg %p55
        %p131 = pneg %p84
        %p132 = pneg %p81
        %s133 = sand.u32 %s71, 1
        %s134 = scalar_lea.sflag [#allocation3], %s133
        %s135 = sand.u32 %s71, 1
        %s136 = smul.addr %s135, 128
        %s137 = scalar_lea.vmem [#allocation2], %s136
        %s138 = smul.u32 16, %s16
        %p139 = scmp.lt.s32.totalorder %s138, 31
        %s140 = scalar_select %p139, %s138, 31
        %s141 = smul.addr %s140, 8
        %s142 = scalar_lea.vmem %s0, %s141
        %s143 = smul.u32 16, %s16
        %s144 = smul.u32 16, %s16
        %v145 = vld [vmem:[%s142] sm:$0xff]
        %v146 = vld [vmem:[%s142 + $0x8] sm:$0xff]
        %v147 = vld [vmem:[%s142 + $0x10] sm:$0xff]
        %v148 = vld [vmem:[%s142 + $0x18] sm:$0xff]
        %v149 = vld [vmem:[%s142 + $0x20] sm:$0xff]
        %v150 = vld [vmem:[%s142 + $0x28] sm:$0xff]
        %v151 = vld [vmem:[%s142 + $0x30] sm:$0xff]
        %v152 = vld [vmem:[%s142 + $0x38] sm:$0xff]
        %v153 = vld [vmem:[%s142 + $0x40] sm:$0xff]
        %v154 = vld [vmem:[%s142 + $0x48] sm:$0xff]
        %v155 = vld [vmem:[%s142 + $0x50] sm:$0xff]
        %v156 = vld [vmem:[%s142 + $0x58] sm:$0xff]
        %v157 = vld [vmem:[%s142 + $0x60] sm:$0xff]
        %v158 = vld [vmem:[%s142 + $0x68] sm:$0xff]
        %v159 = vld [vmem:[%s142 + $0x70] sm:$0xff]
        %v160 = vld [vmem:[%s142 + $0x78] sm:$0xff]
        %v161 = vlaneseq
        %v162 = vand.u32 %v161, 127
        %163 = vset.pattern.permute.xlu0 0
        %164 = vperm.xlu0 %163, %v145
        %v165 = vpop.permute.xlu0 %164
        %166 = vset.pattern.permute.xlu0 0
        %167 = vperm.xlu0 %166, %v146
        %v168 = vpop.permute.xlu0 %167
        %169 = vset.pattern.permute.xlu0 0
        %170 = vperm.xlu0 %169, %v147
        %v171 = vpop.permute.xlu0 %170
        %172 = vset.pattern.permute.xlu0 0
        %173 = vperm.xlu0 %172, %v148
        %v174 = vpop.permute.xlu0 %173
        %175 = vset.pattern.permute.xlu0 0
        %176 = vperm.xlu0 %175, %v149
        %v177 = vpop.permute.xlu0 %176
        %178 = vset.pattern.permute.xlu0 0
        %179 = vperm.xlu0 %178, %v150
        %v180 = vpop.permute.xlu0 %179
        %181 = vset.pattern.permute.xlu0 0
        %182 = vperm.xlu0 %181, %v151
        %v183 = vpop.permute.xlu0 %182
        %184 = vset.pattern.permute.xlu0 0
        %185 = vperm.xlu0 %184, %v152
        %v186 = vpop.permute.xlu0 %185
        %187 = vset.pattern.permute.xlu0 0
        %188 = vperm.xlu0 %187, %v153
        %v189 = vpop.permute.xlu0 %188
        %190 = vset.pattern.permute.xlu0 0
        %191 = vperm.xlu0 %190, %v154
        %v192 = vpop.permute.xlu0 %191
        %193 = vset.pattern.permute.xlu0 0
        %194 = vperm.xlu0 %193, %v155
        %v195 = vpop.permute.xlu0 %194
        %196 = vset.pattern.permute.xlu0 0
        %197 = vperm.xlu0 %196, %v156
        %v198 = vpop.permute.xlu0 %197
        %199 = vset.pattern.permute.xlu0 0
        %200 = vperm.xlu0 %199, %v157
        %v201 = vpop.permute.xlu0 %200
        %202 = vset.pattern.permute.xlu0 0
        %203 = vperm.xlu0 %202, %v158
        %v204 = vpop.permute.xlu0 %203
        %205 = vset.pattern.permute.xlu0 0
        %206 = vperm.xlu0 %205, %v159
        %v207 = vpop.permute.xlu0 %206
        %208 = vset.pattern.permute.xlu0 0
        %209 = vperm.xlu0 %208, %v160
        %v210 = vpop.permute.xlu0 %209
        %vm211 = vcmp.eq.s32.totalorder %v165, %v162
        %vm212 = vcmp.eq.s32.totalorder %v168, %v162
        %vm213 = vcmp.eq.s32.totalorder %v171, %v162
        %vm214 = vcmp.eq.s32.totalorder %v174, %v162
        %vm215 = vcmp.eq.s32.totalorder %v177, %v162
        %vm216 = vcmp.eq.s32.totalorder %v180, %v162
        %vm217 = vcmp.eq.s32.totalorder %v183, %v162
        %vm218 = vcmp.eq.s32.totalorder %v186, %v162
        %vm219 = vcmp.eq.s32.totalorder %v189, %v162
        %vm220 = vcmp.eq.s32.totalorder %v192, %v162
        %vm221 = vcmp.eq.s32.totalorder %v195, %v162
        %vm222 = vcmp.eq.s32.totalorder %v198, %v162
        %vm223 = vcmp.eq.s32.totalorder %v201, %v162
        %vm224 = vcmp.eq.s32.totalorder %v204, %v162
        %vm225 = vcmp.eq.s32.totalorder %v207, %v162
        %vm226 = vcmp.eq.s32.totalorder %v210, %v162
        %v227 = vsel %vm211, 1, 0
        %v228 = vsel %vm212, 1, 0
        %v229 = vsel %vm213, 1, 0
        %v230 = vsel %vm214, 1, 0
        %v231 = vsel %vm215, 1, 0
        %v232 = vsel %vm216, 1, 0
        %v233 = vsel %vm217, 1, 0
        %v234 = vsel %vm218, 1, 0
        %v235 = vsel %vm219, 1, 0
        %v236 = vsel %vm220, 1, 0
        %v237 = vsel %vm221, 1, 0
        %v238 = vsel %vm222, 1, 0
        %v239 = vsel %vm223, 1, 0
        %v240 = vsel %vm224, 1, 0
        %v241 = vsel %vm225, 1, 0
        %v242 = vsel %vm226, 1, 0
        %v243 = vcvt.s32.f32 %v227
        %v244 = vcvt.s32.f32 %v228
        %v245 = vcvt.s32.f32 %v229
        %v246 = vcvt.s32.f32 %v230
        %v247 = vcvt.s32.f32 %v231
        %v248 = vcvt.s32.f32 %v232
        %v249 = vcvt.s32.f32 %v233
        %v250 = vcvt.s32.f32 %v234
        %v251 = vcvt.s32.f32 %v235
        %v252 = vcvt.s32.f32 %v236
        %v253 = vcvt.s32.f32 %v237
        %v254 = vcvt.s32.f32 %v238
        %v255 = vcvt.s32.f32 %v239
        %v256 = vcvt.s32.f32 %v240
        %v257 = vcvt.s32.f32 %v241
        %v258 = vcvt.s32.f32 %v242
        %v259 = vld [vmem:[%s1] sm:$0xff]
        %v260 = vld [vmem:[%s1 + $0x8] sm:$0xff]
        %v261 = vld [vmem:[%s1 + $0x10] sm:$0xff]
        %v262 = vld [vmem:[%s1 + $0x18] sm:$0xff]
        %v263 = vld [vmem:[%s1 + $0x20] sm:$0xff]
        %v264 = vld [vmem:[%s1 + $0x28] sm:$0xff]
        %vm265 = vcmask 392192
        %v267 = vsel %vm265, %v243, 0
        %v270 = vsel %vm265, %v244, 0
        %v273 = vsel %vm265, %v245, 0
        %v276 = vsel %vm265, %v246, 0
        %v279 = vsel %vm265, %v247, 0
        %v282 = vsel %vm265, %v248, 0
        %v285 = vsel %vm265, %v249, 0
        %v288 = vsel %vm265, %v250, 0
        %v291 = vsel %vm265, %v251, 0
        %v294 = vsel %vm265, %v252, 0
        %v297 = vsel %vm265, %v253, 0
        %v300 = vsel %vm265, %v254, 0
        %v303 = vsel %vm265, %v255, 0
        %v306 = vsel %vm265, %v256, 0
        %v309 = vsel %vm265, %v257, 0
        %v312 = vsel %vm265, %v258, 0
        %314 = vmatprep.subr.mxu0 0.0
        %315 = vmatpush1.msra.mxu0 0.0
        %316 = vmatprep.subr.mxu0 0.0
        %317 = vmatpush1.msra.mxu0 0.0
        %318 = vmatprep.subr.mxu0 0.0
        %319 = vmatpush1.msra.mxu0 0.0
        %320 = vmatprep.subr.mxu0 0.0
        %321 = vmatpush1.msra.mxu0 0.0
        %322 = vmatprep.subr.mxu0 0.0
        %323 = vmatpush1.msra.mxu0 0.0
        %324 = vmatprep.subr.mxu0 0.0
        %325 = vmatpush1.msra.mxu0 0.0
        %326 = vmatprep.subr.mxu0 0.0
        %327 = vmatpush1.msra.mxu0 0.0
        %328 = vmatprep.subr.mxu0 0.0
        %329 = vmatpush1.msra.mxu0 0.0
        %330 = vmatprep.subr.mxu0 0.0
        %331 = vmatpush1.msra.mxu0 0.0
        %332 = vmatprep.subr.mxu0 0.0
        %333 = vmatpush1.msra.mxu0 0.0
        %334 = vmatprep.subr.mxu0 0.0
        %335 = vmatpush1.msra.mxu0 %v264
        %336 = vmatprep.subr.mxu0 0.0
        %337 = vmatpush1.msra.mxu0 %v263
        %338 = vmatprep.subr.mxu0 0.0
        %339 = vmatpush1.msra.mxu0 %v262
        %340 = vmatprep.subr.mxu0 0.0
        %341 = vmatpush1.msra.mxu0 %v261
        %342 = vmatprep.subr.mxu0 0.0
        %343 = vmatpush1.msra.mxu0 %v260
        %344 = vmatprep.subr.mxu0 0.0
        %345 = vmatpush1.msra.mxu0 %v259
        %346 = vmatprep.subr.mxu0 0.0
        %347 = vmatpush2.msra.mxu0 0.0
        %348 = vmatprep.subr.mxu0 0.0
        %349 = vmatpush2.msra.mxu0 0.0
        %350 = vmatprep.subr.mxu0 0.0
        %351 = vmatpush2.msra.mxu0 0.0
        %352 = vmatprep.subr.mxu0 0.0
        %353 = vmatpush2.msra.mxu0 0.0
        %354 = vmatprep.subr.mxu0 0.0
        %355 = vmatpush2.msra.mxu0 0.0
        %356 = vmatprep.subr.mxu0 0.0
        %357 = vmatpush2.msra.mxu0 0.0
        %358 = vmatprep.subr.mxu0 0.0
        %359 = vmatpush2.msra.mxu0 0.0
        %360 = vmatprep.subr.mxu0 0.0
        %361 = vmatpush2.msra.mxu0 0.0
        %362 = vmatprep.subr.mxu0 0.0
        %363 = vmatpush2.msra.mxu0 0.0
        %364 = vmatprep.subr.mxu0 0.0
        %365 = vmatpush2.msra.mxu0 0.0
        %366 = vmatprep.subr.mxu0 0.0
        %367 = vmatpush2.msra.mxu0 0.0
        %368 = vmatprep.subr.mxu0 0.0
        %369 = vmatpush2.msra.mxu0 0.0
        %370 = vmatprep.subr.mxu0 0.0
        %371 = vmatpush2.msra.mxu0 0.0
        %372 = vmatprep.subr.mxu0 0.0
        %373 = vmatpush2.msra.mxu0 0.0
        %374 = vmatprep.subr.mxu0 0.0
        %375 = vmatpush2.msra.mxu0 0.0
        %376 = vmatprep.subr.mxu0 0.0
        %377 = vmatpush2.msra.mxu0 0.0
        %378 = vmatprep.mubr.f32.mxu0 0.0
        %379 = vmatmul.mubr.f32.gmra.mxu0 %v267
        %v380 = vpop.f32.mrf.mxu0
        %v381 = vadd.f32 0.0, %v380
        %v382 = vpop.f32.mrf.mxu0
        %383 = vmatprep.mubr.f32.mxu0 0.0
        %384 = vmatmul.mubr.f32.gmra.mxu0 %v270
        %v385 = vpop.f32.mrf.mxu0
        %v386 = vadd.f32 0.0, %v385
        %v387 = vpop.f32.mrf.mxu0
        %388 = vmatprep.mubr.f32.mxu0 0.0
        %389 = vmatmul.mubr.f32.gmra.mxu0 %v273
        %v390 = vpop.f32.mrf.mxu0
        %v391 = vadd.f32 0.0, %v390
        %v392 = vpop.f32.mrf.mxu0
        %393 = vmatprep.mubr.f32.mxu0 0.0
        %394 = vmatmul.mubr.f32.gmra.mxu0 %v276
        %v395 = vpop.f32.mrf.mxu0
        %v396 = vadd.f32 0.0, %v395
        %v397 = vpop.f32.mrf.mxu0
        %398 = vmatprep.mubr.f32.mxu0 0.0
        %399 = vmatmul.mubr.f32.gmra.mxu0 %v279
        %v400 = vpop.f32.mrf.mxu0
        %v401 = vadd.f32 0.0, %v400
        %v402 = vpop.f32.mrf.mxu0
        %403 = vmatprep.mubr.f32.mxu0 0.0
        %404 = vmatmul.mubr.f32.gmra.mxu0 %v282
        %v405 = vpop.f32.mrf.mxu0
        %v406 = vadd.f32 0.0, %v405
        %v407 = vpop.f32.mrf.mxu0
        %408 = vmatprep.mubr.f32.mxu0 0.0
        %409 = vmatmul.mubr.f32.gmra.mxu0 %v285
        %v410 = vpop.f32.mrf.mxu0
        %v411 = vadd.f32 0.0, %v410
        %v412 = vpop.f32.mrf.mxu0
        %413 = vmatprep.mubr.f32.mxu0 0.0
        %414 = vmatmul.mubr.f32.gmra.mxu0 %v288
        %v415 = vpop.f32.mrf.mxu0
        %v416 = vadd.f32 0.0, %v415
        %v417 = vpop.f32.mrf.mxu0
        %418 = vmatprep.mubr.f32.mxu0 0.0
        %419 = vmatmul.mubr.f32.gmra.mxu0 %v291
        %v420 = vpop.f32.mrf.mxu0
        %v421 = vadd.f32 0.0, %v420
        %v422 = vpop.f32.mrf.mxu0
        %423 = vmatprep.mubr.f32.mxu0 0.0
        %424 = vmatmul.mubr.f32.gmra.mxu0 %v294
        %v425 = vpop.f32.mrf.mxu0
        %v426 = vadd.f32 0.0, %v425
        %v427 = vpop.f32.mrf.mxu0
        %428 = vmatprep.mubr.f32.mxu0 0.0
        %429 = vmatmul.mubr.f32.gmra.mxu0 %v297
        %v430 = vpop.f32.mrf.mxu0
        %v431 = vadd.f32 0.0, %v430
        %v432 = vpop.f32.mrf.mxu0
        %433 = vmatprep.mubr.f32.mxu0 0.0
        %434 = vmatmul.mubr.f32.gmra.mxu0 %v300
        %v435 = vpop.f32.mrf.mxu0
        %v436 = vadd.f32 0.0, %v435
        %v437 = vpop.f32.mrf.mxu0
        %438 = vmatprep.mubr.f32.mxu0 0.0
        %439 = vmatmul.mubr.f32.gmra.mxu0 %v303
        %v440 = vpop.f32.mrf.mxu0
        %v441 = vadd.f32 0.0, %v440
        %v442 = vpop.f32.mrf.mxu0
        %443 = vmatprep.mubr.f32.mxu0 0.0
        %444 = vmatmul.mubr.f32.gmra.mxu0 %v306
        %v445 = vpop.f32.mrf.mxu0
        %v446 = vadd.f32 0.0, %v445
        %v447 = vpop.f32.mrf.mxu0
        %448 = vmatprep.mubr.f32.mxu0 0.0
        %449 = vmatmul.mubr.f32.gmra.mxu0 %v309
        %v450 = vpop.f32.mrf.mxu0
        %v451 = vadd.f32 0.0, %v450
        %v452 = vpop.f32.mrf.mxu0
        %453 = vmatprep.mubr.f32.mxu0 0.0
        %454 = vmatmul.mubr.f32.gmra.mxu0 %v312
        %v455 = vpop.f32.mrf.mxu0
        %v456 = vadd.f32 0.0, %v455
        %v457 = vpop.f32.mrf.mxu0
        %458 = vdwg.mxu0
        %459 = vst [vmem:[%s137] sm:$0xff] %v381
        %460 = vst [vmem:[%s137 + $0x8] sm:$0xff] %v386
        %461 = vst [vmem:[%s137 + $0x10] sm:$0xff] %v391
        %462 = vst [vmem:[%s137 + $0x18] sm:$0xff] %v396
        %463 = vst [vmem:[%s137 + $0x20] sm:$0xff] %v401
        %464 = vst [vmem:[%s137 + $0x28] sm:$0xff] %v406
        %465 = vst [vmem:[%s137 + $0x30] sm:$0xff] %v411
        %466 = vst [vmem:[%s137 + $0x38] sm:$0xff] %v416
        %467 = vst [vmem:[%s137 + $0x40] sm:$0xff] %v421
        %468 = vst [vmem:[%s137 + $0x48] sm:$0xff] %v426
        %469 = vst [vmem:[%s137 + $0x50] sm:$0xff] %v431
        %470 = vst [vmem:[%s137 + $0x58] sm:$0xff] %v436
        %471 = vst [vmem:[%s137 + $0x60] sm:$0xff] %v441
        %472 = vst [vmem:[%s137 + $0x68] sm:$0xff] %v446
        %473 = vst [vmem:[%s137 + $0x70] sm:$0xff] %v451
        %474 = vst [vmem:[%s137 + $0x78] sm:$0xff] %v456
        %s475 = sand.u32 %s71, 1
        %s476 = scalar_lea.sflag [#allocation3], %s475
        %s477 = sand.u32 %s71, 1
        %s478 = smul.addr %s477, 128
        %s479 = scalar_lea.vmem [#allocation2], %s478
        // Predicated region
        $region29: #{tpu_custom_call.1} parent=27 // pred_check
          %p480 = pneg %p81
        $region30: #{tpu_custom_call.1} parent=27 // pred_check_branch
          %482 = sbr.rel (%p480) target = $region32
        $region31: #{tpu_custom_call.1} parent=27 // pred_region
          %s483 = smul.u32 16, %s16
          %s485 = ssub.s32 2048, 2048
          %486 = vsyncadd %s476, %s485
          %s487 = smul.addr %s483, 128
          %s488 = scalar_lea.hbm %s2, %s487
          %s489 = sshll.u32 %s479, 4
          %s490 = int_to_ptr.vmem [resolvable:$true] %s489
          %495 = dma.vmem_to_hbm [thread:$0]  %s490, 2048, %s488, %s476, 128, 128, 8
        $region32: #{tpu_custom_call.1} parent=27 // pred_fallthru
          _
      $region28: #{tpu_custom_call.1} parent=5 // pred_fallthru
        _
      %p496 = scmp.le.s32.totalorder 2, %s11
      // Predicated region
      $region33: #{tpu_custom_call.1} parent=5 // pred_check
        %p497 = pneg %p496
      $region34: #{tpu_custom_call.1} parent=5 // pred_check_branch
        %499 = sbr.rel (%p497) target = $region36
      $region35: #{tpu_custom_call.1} parent=5 // pred_region
        %s500 = ssub.s32 %s11, 2
        // Predicated region
        $region37: #{tpu_custom_call.1} parent=35 // pred_check
          %p501 = pneg %p87
        $region38: #{tpu_custom_call.1} parent=35 // pred_check_branch
          %503 = sbr.rel (%p501) target = $region40
        $region39: #{tpu_custom_call.1} parent=35 // pred_region
          %s504 = sand.u32 %s72, 1
          %s505 = scalar_lea.sflag [#allocation3], %s504
          %s506 = sand.u32 %s72, 1
          %s507 = smul.addr %s506, 128
          %s508 = scalar_lea.vmem [#allocation2], %s507
          %509 = dma.done %s505, 2048
        $region40: #{tpu_custom_call.1} parent=35 // pred_fallthru
          _
      $region36: #{tpu_custom_call.1} parent=5 // pred_fallthru
        _
    $region6: #{tpu_custom_call.1} parent=1 // loop_footer
      %s15 = sadd.s32 1, %s11
    $region7: #{tpu_custom_call.1} parent=1 // loop_footer_branch
      %10 = sbr.rel target = $region3
    $region8: #{tpu_custom_call.1} parent=1 // loop_exit
      _
    %510 = vsyncpa [#allocation3], 1
    %s511 = scalar_lea.sflag [#allocation3], 1
    %512 = vsyncpa %s511, 1

</llo_original>
